<compile_context>
chip_gen: v6e
topology: v6e:2x2x1
jax: 0.10.0
libtpu: 0.0.40
codegen_flags: <defaults>
</compile_context>

<pallas_src>
import functools

import jax
import jax.numpy as jnp
from jax import lax
from jax.experimental import pallas as pl
from jax.experimental.pallas import tpu as pltpu

LN_EPS = 1e-5
WEIGHTS_FINAL_INIT = 0.003
BIAS_FINAL_INIT = 0.0003

_SUBLANE = 8          # f32 sublane granularity
_LANE = 128           # lane granularity
_DEFAULT_TILE_B = 256  # MXU row dim on v6e/v7x; use 128 on v5e


def _round_up(n, m):
    return ((n + m - 1) // m) * m


# ----------------------------- Pallas kernel ------------------------------- #

def _ddpg_actor_fused_kernel(*refs):
    """refs = [x, (w, b, gamma, beta) * n_layers, mu_w, mu_b, out]."""
    x_ref = refs[0]
    o_ref = refs[-1]
    mu_w_ref, mu_b_ref = refs[-3], refs[-2]
    layer_refs = refs[1:-3]

    h = x_ref[...]                                   # bf16 [TILE_B, Din]
    for i in range(0, len(layer_refs), 4):
        w_ref, b_ref, g_ref, t_ref = layer_refs[i:i + 4]
        # Linear: bf16 x bf16 on the MXU, f32 accumulate.
        y = jnp.dot(h.astype(jnp.bfloat16), w_ref[...],
                    preferred_element_type=jnp.float32)
        y = y + b_ref[...]                           # [TILE_B, dout] + [1, dout]
        # Single-pass LayerNorm over the feature dim (all f32 math):
        # compute sum and sum-of-squares together so the two XLU reductions
        # issue back-to-back instead of serializing on the mean.
        inv_n = 1.0 / y.shape[-1]
        s = jnp.sum(y, axis=-1, keepdims=True)
        sq = jnp.sum(y * y, axis=-1, keepdims=True)
        mean = s * inv_n
        var = jnp.maximum(sq * inv_n - mean * mean, 0.0)
        y = (y - mean) * lax.rsqrt(var + LN_EPS)
        y = y * g_ref[...] + t_ref[...]
        # ReLU (outer F.relu in DDPGActor.forward is idempotent).
        h = jnp.maximum(y, 0.0)

    # mu layer: Linear -> tanh; output is a lane-dense padded slab.
    y = jnp.dot(h.astype(jnp.bfloat16), mu_w_ref[...],
                preferred_element_type=jnp.float32)
    y = y + mu_b_ref[...]
    o_ref[...] = jnp.tanh(y).astype(o_ref.dtype)


# ----------------------------- wrappers ------------------------------------ #

def _ddpg_fused_call(x_p, params, tile_b):
    Bp, Din = x_p.shape
    out_pad = params["mu_w"].shape[1]
    nb = Bp // tile_b

    # Argument list + BlockSpecs.  x/out are tiled along the batch grid axis;
    # all parameters use a constant block index so they stay VMEM-resident.
    args = [x_p]
    in_specs = [pl.BlockSpec((tile_b, Din), lambda i: (i, 0))]
    max_dout = out_pad
    for layer in params["layers"]:
        for name in ("w", "b", "gamma", "beta"):
            a = layer[name]
            args.append(a)
            in_specs.append(pl.BlockSpec(a.shape, lambda i: (0, 0)))
        max_dout = max(max_dout, layer["w"].shape[1])
    for name in ("mu_w", "mu_b"):
        a = params[name]
        args.append(a)
        in_specs.append(pl.BlockSpec(a.shape, lambda i: (0, 0)))

    out_specs = pl.BlockSpec((tile_b, out_pad), lambda i: (i, 0))

    # Advisory cost estimate for XLA's scheduler (whole custom call).
    flops = 0
    prev = Din
    for layer in params["layers"]:
        dout = layer["w"].shape[1]
        flops += 2 * Bp * prev * dout
        prev = dout
    flops += 2 * Bp * prev * out_pad
    param_bytes = sum(int(a.size) * a.dtype.itemsize for a in args[1:])
    bytes_accessed = (param_bytes
                      + int(x_p.size) * x_p.dtype.itemsize
                      + Bp * out_pad * 4)
    transcendentals = Bp * (len(params["layers"]) + out_pad)  # rsqrt + tanh

    # Explicit VMEM budget: resident params + double-buffered x/out tiles +
    # a few f32 activation slabs.  Capped at 64 MiB so it is valid on v7x.
    x_tile_bytes = tile_b * Din * x_p.dtype.itemsize
    out_tile_bytes = tile_b * out_pad * 4
    act_bytes = 4 * tile_b * max_dout * 4
    vmem_limit = (param_bytes + 2 * (x_tile_bytes + out_tile_bytes)
                  + act_bytes + (4 << 20))
    vmem_limit = int(min(max(vmem_limit, 32 << 20), 64 << 20))

    return pl.pallas_call(
        _ddpg_actor_fused_kernel,
        out_shape=jax.ShapeDtypeStruct((Bp, out_pad), jnp.float32),
        grid=(nb,),
        in_specs=in_specs,
        out_specs=out_specs,
        compiler_params=pltpu.CompilerParams(
            dimension_semantics=("parallel",),
            vmem_limit_bytes=vmem_limit),
        cost_estimate=pl.CostEstimate(
            flops=int(flops),
            transcendentals=int(transcendentals),
            bytes_accessed=int(bytes_accessed)),
    )(*args)


@functools.partial(jax.jit, static_argnames=("output_dim", "tile_b"))
def ddpg_actor_forward(params, x, *, output_dim, tile_b=_DEFAULT_TILE_B):
    B = x.shape[0]
    # Fill the MXU row dim when the batch allows it, but never over-pad tiny
    # inference batches beyond the sublane granularity.
    tile = min(tile_b, _round_up(max(B, _SUBLANE), _SUBLANE))
    Bp = _round_up(B, tile)
    x_bf16 = x.astype(jnp.bfloat16)   # matmuls are bf16 anyway; halves input DMA
    x_p = jnp.pad(x_bf16, ((0, Bp - B), (0, 0))) if Bp != B else x_bf16
    out_p = _ddpg_fused_call(x_p, params, tile)
    return out_p[:B, :output_dim]


# ----------------------------- parameter init ------------------------------ #

def _fan_in_uniform(key, shape, fan_in):
    w = 1.0 / (fan_in ** 0.5)
    return jax.random.uniform(key, shape, jnp.float32, -w, w)


def init_ddpg_actor_params(key, input_dim, output_dim,
                           fc_dims=((256, 1024), (1024, 1024))):
    """Deterministic init mirroring DDPGActor.__init__ (fan-in uniform).

    NOTE: weights are stored bf16 [in, out] (transposed vs PyTorch's [out, in])
    — an intentional numerics change for the bf16 MXU path.
    """
    layer_sizes = [(input_dim, fc_dims[0][0])] + list(fc_dims)
    params = {"layers": []}
    for (din, dout) in layer_sizes:
        key, kw, kb = jax.random.split(key, 3)
        params["layers"].append({
            "w": _fan_in_uniform(kw, (din, dout), fan_in=din).astype(jnp.bfloat16),
            # fan_in_uniform_init(bias) uses bias.size(-1) == dout (per spec).
            "b": _fan_in_uniform(kb, (1, dout), fan_in=dout),
            "gamma": jnp.ones((1, dout), jnp.float32),
            "beta": jnp.zeros((1, dout), jnp.float32),
        })
    key, kw, kb = jax.random.split(key, 3)
    d_last = layer_sizes[-1][1]
    out_pad = _round_up(output_dim, _LANE)
    mu_w = jax.random.uniform(kw, (d_last, output_dim), jnp.float32,
                              -WEIGHTS_FINAL_INIT, WEIGHTS_FINAL_INIT)
    mu_b = jax.random.uniform(kb, (1, output_dim), jnp.float32,
                              -BIAS_FINAL_INIT, BIAS_FINAL_INIT)
    # zero-pad the mu output dim to a full 128-lane slab (lane-dense stores)
    params["mu_w"] = jnp.pad(
        mu_w, ((0, 0), (0, out_pad - output_dim))).astype(jnp.bfloat16)
    params["mu_b"] = jnp.pad(mu_b, ((0, 0), (0, out_pad - output_dim)))
    return params


# ----------------------------- references ---------------------------------- #

def ddpg_actor_forward_ref(params, x, output_dim):
    """Pure-JAX mirror of the kernel math (bf16 matmuls, single-pass f32 LN)."""
    h = x.astype(jnp.bfloat16)
    for layer in params["layers"]:
        y = jnp.dot(h.astype(jnp.bfloat16), layer["w"],
                    preferred_element_type=jnp.float32) + layer["b"]
        inv_n = 1.0 / y.shape[-1]
        mean = jnp.sum(y, axis=-1, keepdims=True) * inv_n
        var = jnp.maximum(
            jnp.sum(y * y, axis=-1, keepdims=True) * inv_n - mean * mean, 0.0)
        y = (y - mean) * lax.rsqrt(var + LN_EPS)
        y = y * layer["gamma"] + layer["beta"]
        h = jnp.maximum(y, 0.0)
    y = jnp.dot(h.astype(jnp.bfloat16), params["mu_w"],
                preferred_element_type=jnp.float32) + params["mu_b"]
    return jnp.tanh(y)[:, :output_dim]


def ddpg_actor_forward_ref_f32(params, x, output_dim):
    """Full-f32 semantic reference (matches the PyTorch module up to bf16 weights)."""
    h = x
    for layer in params["layers"]:
        y = h @ layer["w"].astype(jnp.float32) + layer["b"]
        mean = jnp.mean(y, axis=-1, keepdims=True)
        var = jnp.mean((y - mean) ** 2, axis=-1, keepdims=True)
        y = (y - mean) * lax.rsqrt(var + LN_EPS)
        y = y * layer["gamma"] + layer["beta"]
        h = jnp.maximum(y, 0.0)
    y = h @ params["mu_w"].astype(jnp.float32) + params["mu_b"]
    return jnp.tanh(y)[:, :output_dim]


if __name__ == "__main__":
    key = jax.random.PRNGKey(0)

    # small shapes consistent with the module's forward:
    # x: [batch, input_dim]; hidden dims scaled down from (256, 1024, 1024)
    batch, input_dim, output_dim = 2, 32, 8
    fc_dims = ((128, 256), (256, 256))

    key, k_params, k_x = jax.random.split(key, 3)
    params = init_ddpg_actor_params(k_params, input_dim, output_dim, fc_dims)
    x = jax.random.normal(k_x, (batch, input_dim), jnp.float32)

    out = ddpg_actor_forward(params, x, output_dim=output_dim)
    out = jax.block_until_ready(out)
    assert out.shape == (batch, output_dim)

    # exact-math mirror (same bf16 matmuls / single-pass f32 LN as the kernel)
    ref = ddpg_actor_forward_ref(params, x, output_dim)
    assert jnp.allclose(out, ref, atol=1e-3, rtol=1e-3), \
        float(jnp.max(jnp.abs(out - ref)))

    # loose semantic check against the all-f32 forward
    ref_f32 = ddpg_actor_forward_ref_f32(params, x, output_dim)
    assert jnp.allclose(out, ref_f32, atol=5e-2), \
        float(jnp.max(jnp.abs(out - ref_f32)))

    # exercise the multi-step batch grid (resident weights, tiled x/out):
    # B=20 with tile_b=8 -> padded batch 24, grid=(3,)
    key, k_x2 = jax.random.split(key)
    x2 = jax.random.normal(k_x2, (20, input_dim), jnp.float32)
    out2 = ddpg_actor_forward(params, x2, output_dim=output_dim, tile_b=8)
    out2 = jax.block_until_ready(out2)
    ref2 = ddpg_actor_forward_ref(params, x2, output_dim)
    assert out2.shape == (20, output_dim)
    assert jnp.allclose(out2, ref2, atol=1e-3, rtol=1e-3), \
        float(jnp.max(jnp.abs(out2 - ref2)))

    print("KERNEL_OK")
</pallas_src>

<mosaic_0001>
module attributes {stable_mosaic.version = 11 : i64} {
  func.func @_ddpg_actor_fused_kernel(%arg0: i32, %arg1: memref<8x32xbf16, #tpu.memory_space<vmem>>, %arg2: memref<32x128xbf16, #tpu.memory_space<vmem>>, %arg3: memref<1x128xf32, #tpu.memory_space<vmem>>, %arg4: memref<1x128xf32, #tpu.memory_space<vmem>>, %arg5: memref<1x128xf32, #tpu.memory_space<vmem>>, %arg6: memref<128x256xbf16, #tpu.memory_space<vmem>>, %arg7: memref<1x256xf32, #tpu.memory_space<vmem>>, %arg8: memref<1x256xf32, #tpu.memory_space<vmem>>, %arg9: memref<1x256xf32, #tpu.memory_space<vmem>>, %arg10: memref<256x256xbf16, #tpu.memory_space<vmem>>, %arg11: memref<1x256xf32, #tpu.memory_space<vmem>>, %arg12: memref<1x256xf32, #tpu.memory_space<vmem>>, %arg13: memref<1x256xf32, #tpu.memory_space<vmem>>, %arg14: memref<256x128xbf16, #tpu.memory_space<vmem>>, %arg15: memref<1x128xf32, #tpu.memory_space<vmem>>, %arg16: memref<8x128xf32, #tpu.memory_space<vmem>>) attributes {dimension_semantics = [#tpu.dimension_semantics<parallel>], iteration_bounds = array<i64: 1>, scalar_prefetch = 0 : i64, scratch_operands = 0 : i64, tpu.core_type = #tpu.core_type<tc>, window_params = [{transform_indices = @transform_0, window_bounds = array<i64: 8, 32>}, {pipeline_mode = #tpu.pipeline_mode<synchronous>, transform_indices = @transform_1, window_bounds = array<i64: 32, 128>}, {pipeline_mode = #tpu.pipeline_mode<synchronous>, transform_indices = @transform_2, window_bounds = array<i64: 1, 128>}, {pipeline_mode = #tpu.pipeline_mode<synchronous>, transform_indices = @transform_3, window_bounds = array<i64: 1, 128>}, {pipeline_mode = #tpu.pipeline_mode<synchronous>, transform_indices = @transform_4, window_bounds = array<i64: 1, 128>}, {pipeline_mode = #tpu.pipeline_mode<synchronous>, transform_indices = @transform_5, window_bounds = array<i64: 128, 256>}, {pipeline_mode = #tpu.pipeline_mode<synchronous>, transform_indices = @transform_6, window_bounds = array<i64: 1, 256>}, {pipeline_mode = #tpu.pipeline_mode<synchronous>, transform_indices = @transform_7, window_bounds = array<i64: 1, 256>}, {pipeline_mode = #tpu.pipeline_mode<synchronous>, transform_indices = @transform_8, window_bounds = array<i64: 1, 256>}, {pipeline_mode = #tpu.pipeline_mode<synchronous>, transform_indices = @transform_9, window_bounds = array<i64: 256, 256>}, {pipeline_mode = #tpu.pipeline_mode<synchronous>, transform_indices = @transform_10, window_bounds = array<i64: 1, 256>}, {pipeline_mode = #tpu.pipeline_mode<synchronous>, transform_indices = @transform_11, window_bounds = array<i64: 1, 256>}, {pipeline_mode = #tpu.pipeline_mode<synchronous>, transform_indices = @transform_12, window_bounds = array<i64: 1, 256>}, {pipeline_mode = #tpu.pipeline_mode<synchronous>, transform_indices = @transform_13, window_bounds = array<i64: 256, 128>}, {pipeline_mode = #tpu.pipeline_mode<synchronous>, transform_indices = @transform_14, window_bounds = array<i64: 1, 128>}, {transform_indices = @transform_15, window_bounds = array<i64: 8, 128>}]} {
    %c0 = arith.constant 0 : index
    %c0_0 = arith.constant 0 : index
    %0 = vector.load %arg1[%c0, %c0_0] : memref<8x32xbf16, #tpu.memory_space<vmem>>, vector<8x32xbf16>
    %c0_1 = arith.constant 0 : index
    %c0_2 = arith.constant 0 : index
    %1 = vector.load %arg2[%c0_1, %c0_2] : memref<32x128xbf16, #tpu.memory_space<vmem>>, vector<32x128xbf16>
    %cst = arith.constant dense<0.000000e+00> : vector<8x128xf32>
    %2 = tpu.matmul %0, %1, %cst {dimension_numbers = #tpu.dot_dimension_numbers<[1], [0], [0], [1], [0, 0, 1, 1], [], []>} : vector<8x32xbf16>, vector<32x128xbf16>, vector<8x128xf32> -> vector<8x128xf32>
    %c0_3 = arith.constant 0 : index
    %c0_4 = arith.constant 0 : index
    %3 = vector.load %arg3[%c0_3, %c0_4] : memref<1x128xf32, #tpu.memory_space<vmem>>, vector<1x128xf32>
    %4 = vector.broadcast %3 : vector<1x128xf32> to vector<8x128xf32>
    %5 = arith.addf %2, %4 : vector<8x128xf32>
    %cst_5 = arith.constant dense<0.000000e+00> : vector<8xf32>
    %6 = vector.multi_reduction <add>, %5, %cst_5 [1] : vector<8x128xf32> to vector<8xf32>
    %7 = vector.shape_cast %6 : vector<8xf32> to vector<8x1xf32>
    %8 = arith.mulf %5, %5 : vector<8x128xf32>
    %cst_6 = arith.constant dense<0.000000e+00> : vector<8xf32>
    %9 = vector.multi_reduction <add>, %8, %cst_6 [1] : vector<8x128xf32> to vector<8xf32>
    %10 = vector.shape_cast %9 : vector<8xf32> to vector<8x1xf32>
    %cst_7 = arith.constant 7.812500e-03 : f32
    %11 = vector.broadcast %cst_7 : f32 to vector<8x1xf32>
    %12 = arith.mulf %7, %11 : vector<8x1xf32>
    %cst_8 = arith.constant 7.812500e-03 : f32
    %13 = vector.broadcast %cst_8 : f32 to vector<8x1xf32>
    %14 = arith.mulf %10, %13 : vector<8x1xf32>
    %15 = arith.mulf %12, %12 : vector<8x1xf32>
    %16 = arith.subf %14, %15 : vector<8x1xf32>
    %cst_9 = arith.constant 0.000000e+00 : f32
    %17 = vector.broadcast %cst_9 : f32 to vector<8x1xf32>
    %18 = arith.maximumf %16, %17 : vector<8x1xf32>
    %19 = vector.broadcast %12 : vector<8x1xf32> to vector<8x128xf32>
    %20 = arith.subf %5, %19 : vector<8x128xf32>
    %cst_10 = arith.constant 9.99999974E-6 : f32
    %21 = vector.broadcast %cst_10 : f32 to vector<8x1xf32>
    %22 = arith.addf %18, %21 : vector<8x1xf32>
    %23 = math.rsqrt %22 : vector<8x1xf32>
    %24 = vector.broadcast %23 : vector<8x1xf32> to vector<8x128xf32>
    %25 = arith.mulf %20, %24 : vector<8x128xf32>
    %c0_11 = arith.constant 0 : index
    %c0_12 = arith.constant 0 : index
    %26 = vector.load %arg4[%c0_11, %c0_12] : memref<1x128xf32, #tpu.memory_space<vmem>>, vector<1x128xf32>
    %27 = vector.broadcast %26 : vector<1x128xf32> to vector<8x128xf32>
    %28 = arith.mulf %25, %27 : vector<8x128xf32>
    %c0_13 = arith.constant 0 : index
    %c0_14 = arith.constant 0 : index
    %29 = vector.load %arg5[%c0_13, %c0_14] : memref<1x128xf32, #tpu.memory_space<vmem>>, vector<1x128xf32>
    %30 = vector.broadcast %29 : vector<1x128xf32> to vector<8x128xf32>
    %31 = arith.addf %28, %30 : vector<8x128xf32>
    %cst_15 = arith.constant 0.000000e+00 : f32
    %32 = vector.broadcast %cst_15 : f32 to vector<8x128xf32>
    %33 = arith.maximumf %31, %32 : vector<8x128xf32>
    %34 = arith.truncf %33 : vector<8x128xf32> to vector<8x128xbf16>
    %c0_16 = arith.constant 0 : index
    %c0_17 = arith.constant 0 : index
    %35 = vector.load %arg6[%c0_16, %c0_17] : memref<128x256xbf16, #tpu.memory_space<vmem>>, vector<128x256xbf16>
    %cst_18 = arith.constant dense<0.000000e+00> : vector<8x256xf32>
    %36 = tpu.matmul %34, %35, %cst_18 {dimension_numbers = #tpu.dot_dimension_numbers<[1], [0], [0], [1], [0, 0, 1, 1], [], []>} : vector<8x128xbf16>, vector<128x256xbf16>, vector<8x256xf32> -> vector<8x256xf32>
    %c0_19 = arith.constant 0 : index
    %c0_20 = arith.constant 0 : index
    %37 = vector.load %arg7[%c0_19, %c0_20] : memref<1x256xf32, #tpu.memory_space<vmem>>, vector<1x256xf32>
    %38 = vector.broadcast %37 : vector<1x256xf32> to vector<8x256xf32>
    %39 = arith.addf %36, %38 : vector<8x256xf32>
    %cst_21 = arith.constant dense<0.000000e+00> : vector<8xf32>
    %40 = vector.multi_reduction <add>, %39, %cst_21 [1] : vector<8x256xf32> to vector<8xf32>
    %41 = vector.shape_cast %40 : vector<8xf32> to vector<8x1xf32>
    %42 = arith.mulf %39, %39 : vector<8x256xf32>
    %cst_22 = arith.constant dense<0.000000e+00> : vector<8xf32>
    %43 = vector.multi_reduction <add>, %42, %cst_22 [1] : vector<8x256xf32> to vector<8xf32>
    %44 = vector.shape_cast %43 : vector<8xf32> to vector<8x1xf32>
    %cst_23 = arith.constant 3.906250e-03 : f32
    %45 = vector.broadcast %cst_23 : f32 to vector<8x1xf32>
    %46 = arith.mulf %41, %45 : vector<8x1xf32>
    %cst_24 = arith.constant 3.906250e-03 : f32
    %47 = vector.broadcast %cst_24 : f32 to vector<8x1xf32>
    %48 = arith.mulf %44, %47 : vector<8x1xf32>
    %49 = arith.mulf %46, %46 : vector<8x1xf32>
    %50 = arith.subf %48, %49 : vector<8x1xf32>
    %cst_25 = arith.constant 0.000000e+00 : f32
    %51 = vector.broadcast %cst_25 : f32 to vector<8x1xf32>
    %52 = arith.maximumf %50, %51 : vector<8x1xf32>
    %53 = vector.broadcast %46 : vector<8x1xf32> to vector<8x256xf32>
    %54 = arith.subf %39, %53 : vector<8x256xf32>
    %cst_26 = arith.constant 9.99999974E-6 : f32
    %55 = vector.broadcast %cst_26 : f32 to vector<8x1xf32>
    %56 = arith.addf %52, %55 : vector<8x1xf32>
    %57 = math.rsqrt %56 : vector<8x1xf32>
    %58 = vector.broadcast %57 : vector<8x1xf32> to vector<8x256xf32>
    %59 = arith.mulf %54, %58 : vector<8x256xf32>
    %c0_27 = arith.constant 0 : index
    %c0_28 = arith.constant 0 : index
    %60 = vector.load %arg8[%c0_27, %c0_28] : memref<1x256xf32, #tpu.memory_space<vmem>>, vector<1x256xf32>
    %61 = vector.broadcast %60 : vector<1x256xf32> to vector<8x256xf32>
    %62 = arith.mulf %59, %61 : vector<8x256xf32>
    %c0_29 = arith.constant 0 : index
    %c0_30 = arith.constant 0 : index
    %63 = vector.load %arg9[%c0_29, %c0_30] : memref<1x256xf32, #tpu.memory_space<vmem>>, vector<1x256xf32>
    %64 = vector.broadcast %63 : vector<1x256xf32> to vector<8x256xf32>
    %65 = arith.addf %62, %64 : vector<8x256xf32>
    %cst_31 = arith.constant 0.000000e+00 : f32
    %66 = vector.broadcast %cst_31 : f32 to vector<8x256xf32>
    %67 = arith.maximumf %65, %66 : vector<8x256xf32>
    %68 = arith.truncf %67 : vector<8x256xf32> to vector<8x256xbf16>
    %c0_32 = arith.constant 0 : index
    %c0_33 = arith.constant 0 : index
    %69 = vector.load %arg10[%c0_32, %c0_33] : memref<256x256xbf16, #tpu.memory_space<vmem>>, vector<256x256xbf16>
    %cst_34 = arith.constant dense<0.000000e+00> : vector<8x256xf32>
    %70 = tpu.matmul %68, %69, %cst_34 {dimension_numbers = #tpu.dot_dimension_numbers<[1], [0], [0], [1], [0, 0, 1, 1], [], []>} : vector<8x256xbf16>, vector<256x256xbf16>, vector<8x256xf32> -> vector<8x256xf32>
    %c0_35 = arith.constant 0 : index
    %c0_36 = arith.constant 0 : index
    %71 = vector.load %arg11[%c0_35, %c0_36] : memref<1x256xf32, #tpu.memory_space<vmem>>, vector<1x256xf32>
    %72 = vector.broadcast %71 : vector<1x256xf32> to vector<8x256xf32>
    %73 = arith.addf %70, %72 : vector<8x256xf32>
    %cst_37 = arith.constant dense<0.000000e+00> : vector<8xf32>
    %74 = vector.multi_reduction <add>, %73, %cst_37 [1] : vector<8x256xf32> to vector<8xf32>
    %75 = vector.shape_cast %74 : vector<8xf32> to vector<8x1xf32>
    %76 = arith.mulf %73, %73 : vector<8x256xf32>
    %cst_38 = arith.constant dense<0.000000e+00> : vector<8xf32>
    %77 = vector.multi_reduction <add>, %76, %cst_38 [1] : vector<8x256xf32> to vector<8xf32>
    %78 = vector.shape_cast %77 : vector<8xf32> to vector<8x1xf32>
    %cst_39 = arith.constant 3.906250e-03 : f32
    %79 = vector.broadcast %cst_39 : f32 to vector<8x1xf32>
    %80 = arith.mulf %75, %79 : vector<8x1xf32>
    %cst_40 = arith.constant 3.906250e-03 : f32
    %81 = vector.broadcast %cst_40 : f32 to vector<8x1xf32>
    %82 = arith.mulf %78, %81 : vector<8x1xf32>
    %83 = arith.mulf %80, %80 : vector<8x1xf32>
    %84 = arith.subf %82, %83 : vector<8x1xf32>
    %cst_41 = arith.constant 0.000000e+00 : f32
    %85 = vector.broadcast %cst_41 : f32 to vector<8x1xf32>
    %86 = arith.maximumf %84, %85 : vector<8x1xf32>
    %87 = vector.broadcast %80 : vector<8x1xf32> to vector<8x256xf32>
    %88 = arith.subf %73, %87 : vector<8x256xf32>
    %cst_42 = arith.constant 9.99999974E-6 : f32
    %89 = vector.broadcast %cst_42 : f32 to vector<8x1xf32>
    %90 = arith.addf %86, %89 : vector<8x1xf32>
    %91 = math.rsqrt %90 : vector<8x1xf32>
    %92 = vector.broadcast %91 : vector<8x1xf32> to vector<8x256xf32>
    %93 = arith.mulf %88, %92 : vector<8x256xf32>
    %c0_43 = arith.constant 0 : index
    %c0_44 = arith.constant 0 : index
    %94 = vector.load %arg12[%c0_43, %c0_44] : memref<1x256xf32, #tpu.memory_space<vmem>>, vector<1x256xf32>
    %95 = vector.broadcast %94 : vector<1x256xf32> to vector<8x256xf32>
    %96 = arith.mulf %93, %95 : vector<8x256xf32>
    %c0_45 = arith.constant 0 : index
    %c0_46 = arith.constant 0 : index
    %97 = vector.load %arg13[%c0_45, %c0_46] : memref<1x256xf32, #tpu.memory_space<vmem>>, vector<1x256xf32>
    %98 = vector.broadcast %97 : vector<1x256xf32> to vector<8x256xf32>
    %99 = arith.addf %96, %98 : vector<8x256xf32>
    %cst_47 = arith.constant 0.000000e+00 : f32
    %100 = vector.broadcast %cst_47 : f32 to vector<8x256xf32>
    %101 = arith.maximumf %99, %100 : vector<8x256xf32>
    %102 = arith.truncf %101 : vector<8x256xf32> to vector<8x256xbf16>
    %c0_48 = arith.constant 0 : index
    %c0_49 = arith.constant 0 : index
    %103 = vector.load %arg14[%c0_48, %c0_49] : memref<256x128xbf16, #tpu.memory_space<vmem>>, vector<256x128xbf16>
    %cst_50 = arith.constant dense<0.000000e+00> : vector<8x128xf32>
    %104 = tpu.matmul %102, %103, %cst_50 {dimension_numbers = #tpu.dot_dimension_numbers<[1], [0], [0], [1], [0, 0, 1, 1], [], []>} : vector<8x256xbf16>, vector<256x128xbf16>, vector<8x128xf32> -> vector<8x128xf32>
    %c0_51 = arith.constant 0 : index
    %c0_52 = arith.constant 0 : index
    %105 = vector.load %arg15[%c0_51, %c0_52] : memref<1x128xf32, #tpu.memory_space<vmem>>, vector<1x128xf32>
    %106 = vector.broadcast %105 : vector<1x128xf32> to vector<8x128xf32>
    %107 = arith.addf %104, %106 : vector<8x128xf32>
    %108 = math.tanh %107 : vector<8x128xf32>
    %c0_53 = arith.constant 0 : index
    %c0_54 = arith.constant 0 : index
    %109 = vector.load %arg16[%c0_53, %c0_54] : memref<8x128xf32, #tpu.memory_space<vmem>>, vector<8x128xf32>
    tpu.vector_store %arg16[%c0_53, %c0_54], %108 {strides = array<i32>} : memref<8x128xf32, #tpu.memory_space<vmem>>, vector<8x128xf32>,
    return
  }
  func.func @transform_0(%arg0: i32) -> (i32, i32) {
    %c0_i32 = arith.constant 0 : i32
    %c0_i32_0 = arith.constant 0 : i32
    return %arg0, %c0_i32 : i32, i32
  }
  func.func @transform_1(%arg0: i32) -> (i32, i32) {
    %c0_i32 = arith.constant 0 : i32
    %c0_i32_0 = arith.constant 0 : i32
    %c0_i32_1 = arith.constant 0 : i32
    return %c0_i32, %c0_i32_0 : i32, i32
  }
  func.func @transform_2(%arg0: i32) -> (i32, i32) {
    %c0_i32 = arith.constant 0 : i32
    %c0_i32_0 = arith.constant 0 : i32
    %c0_i32_1 = arith.constant 0 : i32
    return %c0_i32, %c0_i32_0 : i32, i32
  }
  func.func @transform_3(%arg0: i32) -> (i32, i32) {
    %c0_i32 = arith.constant 0 : i32
    %c0_i32_0 = arith.constant 0 : i32
    %c0_i32_1 = arith.constant 0 : i32
    return %c0_i32, %c0_i32_0 : i32, i32
  }
  func.func @transform_4(%arg0: i32) -> (i32, i32) {
    %c0_i32 = arith.constant 0 : i32
    %c0_i32_0 = arith.constant 0 : i32
    %c0_i32_1 = arith.constant 0 : i32
    return %c0_i32, %c0_i32_0 : i32, i32
  }
  func.func @transform_5(%arg0: i32) -> (i32, i32) {
    %c0_i32 = arith.constant 0 : i32
    %c0_i32_0 = arith.constant 0 : i32
    %c0_i32_1 = arith.constant 0 : i32
    return %c0_i32, %c0_i32_0 : i32, i32
  }
  func.func @transform_6(%arg0: i32) -> (i32, i32) {
    %c0_i32 = arith.constant 0 : i32
    %c0_i32_0 = arith.constant 0 : i32
    %c0_i32_1 = arith.constant 0 : i32
    return %c0_i32, %c0_i32_0 : i32, i32
  }
  func.func @transform_7(%arg0: i32) -> (i32, i32) {
    %c0_i32 = arith.constant 0 : i32
    %c0_i32_0 = arith.constant 0 : i32
    %c0_i32_1 = arith.constant 0 : i32
    return %c0_i32, %c0_i32_0 : i32, i32
  }
  func.func @transform_8(%arg0: i32) -> (i32, i32) {
    %c0_i32 = arith.constant 0 : i32
    %c0_i32_0 = arith.constant 0 : i32
    %c0_i32_1 = arith.constant 0 : i32
    return %c0_i32, %c0_i32_0 : i32, i32
  }
  func.func @transform_9(%arg0: i32) -> (i32, i32) {
    %c0_i32 = arith.constant 0 : i32
    %c0_i32_0 = arith.constant 0 : i32
    %c0_i32_1 = arith.constant 0 : i32
    return %c0_i32, %c0_i32_0 : i32, i32
  }
  func.func @transform_10(%arg0: i32) -> (i32, i32) {
    %c0_i32 = arith.constant 0 : i32
    %c0_i32_0 = arith.constant 0 : i32
    %c0_i32_1 = arith.constant 0 : i32
    return %c0_i32, %c0_i32_0 : i32, i32
  }
  func.func @transform_11(%arg0: i32) -> (i32, i32) {
    %c0_i32 = arith.constant 0 : i32
    %c0_i32_0 = arith.constant 0 : i32
    %c0_i32_1 = arith.constant 0 : i32
    return %c0_i32, %c0_i32_0 : i32, i32
  }
  func.func @transform_12(%arg0: i32) -> (i32, i32) {
    %c0_i32 = arith.constant 0 : i32
    %c0_i32_0 = arith.constant 0 : i32
    %c0_i32_1 = arith.constant 0 : i32
    return %c0_i32, %c0_i32_0 : i32, i32
  }
  func.func @transform_13(%arg0: i32) -> (i32, i32) {
    %c0_i32 = arith.constant 0 : i32
    %c0_i32_0 = arith.constant 0 : i32
    %c0_i32_1 = arith.constant 0 : i32
    return %c0_i32, %c0_i32_0 : i32, i32
  }
  func.func @transform_14(%arg0: i32) -> (i32, i32) {
    %c0_i32 = arith.constant 0 : i32
    %c0_i32_0 = arith.constant 0 : i32
    %c0_i32_1 = arith.constant 0 : i32
    return %c0_i32, %c0_i32_0 : i32, i32
  }
  func.func @transform_15(%arg0: i32) -> (i32, i32) {
    %c0_i32 = arith.constant 0 : i32
    %c0_i32_0 = arith.constant 0 : i32
    return %arg0, %c0_i32 : i32, i32
  }
}

</mosaic_0001>

<llo_original>
// kernel: ddpg_actor_forward.1
$region0: #{ddpg_actor_forward.1}
  #allocation0 [shape = 'u32[]', space=smem, size = 0x4, offset = 0x4, fixed_abs, tag = 'smem constant byte address 0x4 - core index']
  #allocation1 [shape = 'u32[144,128]{1,0:T(1,128)}', space=vmem, size = 0x12000, scoped, tag = 'internal scratch']
  %s0 = inlined_call_operand.vmem [shape: bf16[8,32], index: 0, kind: input, shape index: {}]
  %s1 = inlined_call_operand.hbm [shape: bf16[32,128], index: 1, kind: input, shape index: {}]
  %s2 = inlined_call_operand.hbm [shape: f32[1,128], index: 2, kind: input, shape index: {}]
  %s3 = inlined_call_operand.hbm [shape: f32[1,128], index: 3, kind: input, shape index: {}]
  %s4 = inlined_call_operand.hbm [shape: f32[1,128], index: 4, kind: input, shape index: {}]
  %s5 = inlined_call_operand.hbm [shape: bf16[128,256], index: 5, kind: input, shape index: {}]
  %s6 = inlined_call_operand.vmem [shape: f32[1,256], index: 6, kind: input, shape index: {}]
  %s7 = inlined_call_operand.vmem [shape: f32[1,256], index: 7, kind: input, shape index: {}]
  %s8 = inlined_call_operand.vmem [shape: f32[1,256], index: 8, kind: input, shape index: {}]
  %s9 = inlined_call_operand.hbm [shape: bf16[256,256], index: 9, kind: input, shape index: {}]
  %s10 = inlined_call_operand.vmem [shape: f32[1,256], index: 10, kind: input, shape index: {}]
  %s11 = inlined_call_operand.vmem [shape: f32[1,256], index: 11, kind: input, shape index: {}]
  %s12 = inlined_call_operand.vmem [shape: f32[1,256], index: 12, kind: input, shape index: {}]
  %s13 = inlined_call_operand.hbm [shape: bf16[256,128], index: 13, kind: input, shape index: {}]
  %s14 = inlined_call_operand.vmem [shape: f32[1,128], index: 14, kind: input, shape index: {}]
  %s15 = inlined_call_operand.vmem [shape: f32[8,128], index: 15, kind: output, shape index: {}]
  %s16 = sld [smem:[#allocation0]]
  $region98: #{ddpg_actor_forward.1} parent=0
    _
  %s18 = ssub.s32 1, %s16
  %s19 = scalar_select 0, %s18, %s16
  $region1: #{ddpg_actor_forward.1} parent=0
    #allocation2 [shape = 'u8[8192]{0}', space=vmem, size = 0x2000, scoped, tag = 'input window, operand 1, single buffered']
    #allocation3 [shape = 's32[1]{0}', space=sflag, size = 0x4, scoped, tag = 'scoped memory for ddpg_actor_forward.1']
    #allocation4 [shape = 'u8[512]{0}', space=vmem, size = 0x400, scoped, tag = 'input window, operand 2, single buffered']
    #allocation5 [shape = 's32[1]{0}', space=sflag, size = 0x4, scoped, tag = 'scoped memory for ddpg_actor_forward.1']
    #allocation6 [shape = 'u8[512]{0}', space=vmem, size = 0x400, scoped, tag = 'input window, operand 3, single buffered']
    #allocation7 [shape = 'u8[512]{0}', space=vmem, size = 0x400, scoped, tag = 'input window, operand 4, single buffered']
    #allocation8 [shape = 's32[1]{0}', space=sflag, size = 0x4, scoped, tag = 'scoped memory for ddpg_actor_forward.1']
    #allocation9 [shape = 'u8[65536]{0}', space=vmem, size = 0x10000, scoped, tag = 'input window, operand 5, single buffered']
    #allocation10 [shape = 'u8[131072]{0}', space=vmem, size = 0x20000, scoped, tag = 'input window, operand 9, single buffered']
    #allocation11 [shape = 's32[1]{0}', space=sflag, size = 0x4, scoped, tag = 'scoped memory for ddpg_actor_forward.1']
    #allocation12 [shape = 'u8[65536]{0}', space=vmem, size = 0x10000, scoped, tag = 'input window, operand 13, single buffered']
    %20 = vsyncpa [#allocation3], 0
    %21 = vsyncpa [#allocation5], 0
    %22 = vsyncpa [#allocation8], 0
    %23 = vsyncpa [#allocation11], 0
    // Predicated region
    $region2: #{ddpg_actor_forward.1} parent=1 // pred_check
      _
    $region3: #{ddpg_actor_forward.1} parent=1 // pred_check_branch
      %25 = sbr.rel (0) target = $region5
    $region4: #{ddpg_actor_forward.1} parent=1 // pred_region
      _
    $region5: #{ddpg_actor_forward.1} parent=1 // pred_fallthru
      _
    // Predicated region
    $region6: #{ddpg_actor_forward.1} parent=1 // pred_check
      _
    $region7: #{ddpg_actor_forward.1} parent=1 // pred_check_branch
      %27 = sbr.rel (0) target = $region9
    $region8: #{ddpg_actor_forward.1} parent=1 // pred_region
      %s29 = ssub.s32 256, 256
      %30 = vsyncadd [#allocation3], %s29
      %s31 = sshll.u32 [#allocation2], 4
      %s32 = int_to_ptr.vmem [resolvable:$true] %s31
      %37 = dma.hbm_to_vmem [thread:$0]  %s1, 256, %s32, [#allocation3], 64, 64, 4
    $region9: #{ddpg_actor_forward.1} parent=1 // pred_fallthru
      _
    // Predicated region
    $region10: #{ddpg_actor_forward.1} parent=1 // pred_check
      _
    $region11: #{ddpg_actor_forward.1} parent=1 // pred_check_branch
      %39 = sbr.rel (0) target = $region13
    $region12: #{ddpg_actor_forward.1} parent=1 // pred_region
      %s41 = ssub.s32 16, 16
      %42 = vsyncadd [#allocation5], %s41
      %s44 = sshll.u32 [#allocation4], 4
      %s45 = int_to_ptr.vmem [resolvable:$true] %s44
      %47 = dma.hbm_to_vmem [thread:$0]  %s2, 16, %s45, [#allocation5]
    $region13: #{ddpg_actor_forward.1} parent=1 // pred_fallthru
      _
    // Predicated region
    $region14: #{ddpg_actor_forward.1} parent=1 // pred_check
      _
    $region15: #{ddpg_actor_forward.1} parent=1 // pred_check_branch
      %49 = sbr.rel (0) target = $region17
    $region16: #{ddpg_actor_forward.1} parent=1 // pred_region
      %s51 = ssub.s32 16, 16
      %52 = vsyncadd [#allocation5], %s51
      %s54 = sshll.u32 [#allocation6], 4
      %s55 = int_to_ptr.vmem [resolvable:$true] %s54
      %57 = dma.hbm_to_vmem [thread:$0]  %s3, 16, %s55, [#allocation5]
    $region17: #{ddpg_actor_forward.1} parent=1 // pred_fallthru
      _
    // Predicated region
    $region18: #{ddpg_actor_forward.1} parent=1 // pred_check
      _
    $region19: #{ddpg_actor_forward.1} parent=1 // pred_check_branch
      %59 = sbr.rel (0) target = $region21
    $region20: #{ddpg_actor_forward.1} parent=1 // pred_region
      %s61 = ssub.s32 16, 16
      %62 = vsyncadd [#allocation8], %s61
      %s64 = sshll.u32 [#allocation7], 4
      %s65 = int_to_ptr.vmem [resolvable:$true] %s64
      %67 = dma.hbm_to_vmem [thread:$0]  %s4, 16, %s65, [#allocation8]
    $region21: #{ddpg_actor_forward.1} parent=1 // pred_fallthru
      _
    // Predicated region
    $region22: #{ddpg_actor_forward.1} parent=1 // pred_check
      _
    $region23: #{ddpg_actor_forward.1} parent=1 // pred_check_branch
      %69 = sbr.rel (0) target = $region25
    $region24: #{ddpg_actor_forward.1} parent=1 // pred_region
      %s71 = ssub.s32 2048, 2048
      %72 = vsyncadd [#allocation8], %s71
      %s73 = sshll.u32 [#allocation9], 4
      %s74 = int_to_ptr.vmem [resolvable:$true] %s73
      %79 = dma.hbm_to_vmem [thread:$0]  %s5, 2048, %s74, [#allocation8], 128, 128, 8
    $region25: #{ddpg_actor_forward.1} parent=1 // pred_fallthru
      _
    // Predicated region
    $region26: #{ddpg_actor_forward.1} parent=1 // pred_check
      _
    $region27: #{ddpg_actor_forward.1} parent=1 // pred_check_branch
      %81 = sbr.rel (0) target = $region29
    $region28: #{ddpg_actor_forward.1} parent=1 // pred_region
      _
    $region29: #{ddpg_actor_forward.1} parent=1 // pred_fallthru
      _
    // Predicated region
    $region30: #{ddpg_actor_forward.1} parent=1 // pred_check
      _
    $region31: #{ddpg_actor_forward.1} parent=1 // pred_check_branch
      %83 = sbr.rel (0) target = $region33
    $region32: #{ddpg_actor_forward.1} parent=1 // pred_region
      _
    $region33: #{ddpg_actor_forward.1} parent=1 // pred_fallthru
      _
    // Predicated region
    $region34: #{ddpg_actor_forward.1} parent=1 // pred_check
      _
    $region35: #{ddpg_actor_forward.1} parent=1 // pred_check_branch
      %85 = sbr.rel (0) target = $region37
    $region36: #{ddpg_actor_forward.1} parent=1 // pred_region
      _
    $region37: #{ddpg_actor_forward.1} parent=1 // pred_fallthru
      _
    // Predicated region
    $region38: #{ddpg_actor_forward.1} parent=1 // pred_check
      _
    $region39: #{ddpg_actor_forward.1} parent=1 // pred_check_branch
      %87 = sbr.rel (0) target = $region41
    $region40: #{ddpg_actor_forward.1} parent=1 // pred_region
      %s89 = ssub.s32 4096, 4096
      %90 = vsyncadd [#allocation11], %s89
      %s91 = sshll.u32 [#allocation10], 4
      %s92 = int_to_ptr.vmem [resolvable:$true] %s91
      %97 = dma.hbm_to_vmem [thread:$0]  %s9, 4096, %s92, [#allocation11], 128, 128, 8
    $region41: #{ddpg_actor_forward.1} parent=1 // pred_fallthru
      _
    // Predicated region
    $region42: #{ddpg_actor_forward.1} parent=1 // pred_check
      _
    $region43: #{ddpg_actor_forward.1} parent=1 // pred_check_branch
      %99 = sbr.rel (0) target = $region45
    $region44: #{ddpg_actor_forward.1} parent=1 // pred_region
      _
    $region45: #{ddpg_actor_forward.1} parent=1 // pred_fallthru
      _
    // Predicated region
    $region46: #{ddpg_actor_forward.1} parent=1 // pred_check
      _
    $region47: #{ddpg_actor_forward.1} parent=1 // pred_check_branch
      %101 = sbr.rel (0) target = $region49
    $region48: #{ddpg_actor_forward.1} parent=1 // pred_region
      _
    $region49: #{ddpg_actor_forward.1} parent=1 // pred_fallthru
      _
    // Predicated region
    $region50: #{ddpg_actor_forward.1} parent=1 // pred_check
      _
    $region51: #{ddpg_actor_forward.1} parent=1 // pred_check_branch
      %103 = sbr.rel (0) target = $region53
    $region52: #{ddpg_actor_forward.1} parent=1 // pred_region
      _
    $region53: #{ddpg_actor_forward.1} parent=1 // pred_fallthru
      _
    // Predicated region
    $region54: #{ddpg_actor_forward.1} parent=1 // pred_check
      _
    $region55: #{ddpg_actor_forward.1} parent=1 // pred_check_branch
      %105 = sbr.rel (0) target = $region57
    $region56: #{ddpg_actor_forward.1} parent=1 // pred_region
      %s107 = ssub.s32 2048, 2048
      %108 = vsyncadd [#allocation11], %s107
      %s109 = sshll.u32 [#allocation12], 4
      %s110 = int_to_ptr.vmem [resolvable:$true] %s109
      %115 = dma.hbm_to_vmem [thread:$0]  %s13, 2048, %s110, [#allocation11], 64, 64, 4
    $region57: #{ddpg_actor_forward.1} parent=1 // pred_fallthru
      _
    // Predicated region
    $region58: #{ddpg_actor_forward.1} parent=1 // pred_check
      _
    $region59: #{ddpg_actor_forward.1} parent=1 // pred_check_branch
      %117 = sbr.rel (0) target = $region61
    $region60: #{ddpg_actor_forward.1} parent=1 // pred_region
      _
    $region61: #{ddpg_actor_forward.1} parent=1 // pred_fallthru
      _
    // Predicated region
    $region62: #{ddpg_actor_forward.1} parent=1 // pred_check
      _
    $region63: #{ddpg_actor_forward.1} parent=1 // pred_check_branch
      %119 = sbr.rel (0) target = $region65
    $region64: #{ddpg_actor_forward.1} parent=1 // pred_region
      %120 = dma.done [#allocation3], 256
    $region65: #{ddpg_actor_forward.1} parent=1 // pred_fallthru
      _
    // Predicated region
    $region66: #{ddpg_actor_forward.1} parent=1 // pred_check
      _
    $region67: #{ddpg_actor_forward.1} parent=1 // pred_check_branch
      %122 = sbr.rel (0) target = $region69
    $region68: #{ddpg_actor_forward.1} parent=1 // pred_region
      %123 = dma.done [#allocation5], 16
    $region69: #{ddpg_actor_forward.1} parent=1 // pred_fallthru
      _
    // Predicated region
    $region70: #{ddpg_actor_forward.1} parent=1 // pred_check
      _
    $region71: #{ddpg_actor_forward.1} parent=1 // pred_check_branch
      %125 = sbr.rel (0) target = $region73
    $region72: #{ddpg_actor_forward.1} parent=1 // pred_region
      %126 = dma.done [#allocation5], 16
    $region73: #{ddpg_actor_forward.1} parent=1 // pred_fallthru
      _
    // Predicated region
    $region74: #{ddpg_actor_forward.1} parent=1 // pred_check
      _
    $region75: #{ddpg_actor_forward.1} parent=1 // pred_check_branch
      %128 = sbr.rel (0) target = $region77
    $region76: #{ddpg_actor_forward.1} parent=1 // pred_region
      %129 = dma.done [#allocation8], 16
    $region77: #{ddpg_actor_forward.1} parent=1 // pred_fallthru
      _
    // Predicated region
    $region78: #{ddpg_actor_forward.1} parent=1 // pred_check
      _
    $region79: #{ddpg_actor_forward.1} parent=1 // pred_check_branch
      %131 = sbr.rel (0) target = $region81
    $region80: #{ddpg_actor_forward.1} parent=1 // pred_region
      %132 = dma.done [#allocation8], 2048
    $region81: #{ddpg_actor_forward.1} parent=1 // pred_fallthru
      _
    // Predicated region
    $region82: #{ddpg_actor_forward.1} parent=1 // pred_check
      _
    $region83: #{ddpg_actor_forward.1} parent=1 // pred_check_branch
      %134 = sbr.rel (0) target = $region85
    $region84: #{ddpg_actor_forward.1} parent=1 // pred_region
      %135 = dma.done [#allocation11], 4096
    $region85: #{ddpg_actor_forward.1} parent=1 // pred_fallthru
      _
    // Predicated region
    $region86: #{ddpg_actor_forward.1} parent=1 // pred_check
      _
    $region87: #{ddpg_actor_forward.1} parent=1 // pred_check_branch
      %137 = sbr.rel (0) target = $region89
    $region88: #{ddpg_actor_forward.1} parent=1 // pred_region
      %138 = dma.done [#allocation11], 2048
    $region89: #{ddpg_actor_forward.1} parent=1 // pred_fallthru
      _
    %v140 = vld [vmem:[%s0] sm:$0xf]
    %v141 = vld [vmem:[#allocation2] sm:$0xf]
    %v142 = vld [vmem:[#allocation2 + $0x4] sm:$0xf]
    %v143 = vld [vmem:[#allocation2 + $0x8] sm:$0xf]
    %v144 = vld [vmem:[#allocation2 + $0xc] sm:$0xf]
    %v145 = vld [vmem:[#allocation4] sm:$0x1]
    %v147 = vlaneseq
    %v148 = vshrl.u32 %v147, 7
    %v149 = vsub.s32 0, %v148
    %v150 = vrot.slane %v145, %v149
    %v156 = vunpack.c.l.b16 %v141
    %v157 = vunpack.c.l.b16 %v142
    %v158 = vunpack.c.l.b16 %v143
    %v159 = vunpack.c.l.b16 %v144
    %v160 = vpack.c.b16 %v157, %v156
    %v161 = vpack.c.b16 %v159, %v158
    %vm164 = vcmask 261120
    %v166 = vsel %vm164, %v140, 0
    %168 = vmatprep.subr.bf16.mxu0 0
    %169 = vmatpush1.bf16.msra.mxu0 0
    %170 = vmatprep.subr.bf16.mxu0 0
    %171 = vmatpush1.bf16.msra.mxu0 0
    %172 = vmatprep.subr.bf16.mxu0 0
    %173 = vmatpush1.bf16.msra.mxu0 0
    %174 = vmatprep.subr.bf16.mxu0 0
    %175 = vmatpush1.bf16.msra.mxu0 0
    %176 = vmatprep.subr.bf16.mxu0 0
    %177 = vmatpush1.bf16.msra.mxu0 0
    %178 = vmatprep.subr.bf16.mxu0 0
    %179 = vmatpush1.bf16.msra.mxu0 0
    %180 = vmatprep.subr.bf16.mxu0 0
    %181 = vmatpush1.bf16.msra.mxu0 %v161
    %182 = vmatprep.subr.bf16.mxu0 0
    %183 = vmatpush1.bf16.msra.mxu0 %v160
    %184 = vmatprep.subr.bf16.mxu0 0
    %185 = vmatpush2.bf16.msra.mxu0 0
    %186 = vmatprep.subr.bf16.mxu0 0
    %187 = vmatpush2.bf16.msra.mxu0 0
    %188 = vmatprep.subr.bf16.mxu0 0
    %189 = vmatpush2.bf16.msra.mxu0 0
    %190 = vmatprep.subr.bf16.mxu0 0
    %191 = vmatpush2.bf16.msra.mxu0 0
    %192 = vmatprep.subr.bf16.mxu0 0
    %193 = vmatpush2.bf16.msra.mxu0 0
    %194 = vmatprep.subr.bf16.mxu0 0
    %195 = vmatpush2.bf16.msra.mxu0 0
    %196 = vmatprep.subr.bf16.mxu0 0
    %197 = vmatpush2.bf16.msra.mxu0 0
    %198 = vmatprep.subr.bf16.mxu0 0
    %199 = vmatpush2.bf16.msra.mxu0 0
    %200 = vmatprep.mubr.bf16.mxu0 0
    %201 = vmatmul.mubr.bf16.gmra.mxu0 %v166
    %v202 = vpop.f32.mrf.mxu0
    %v203 = vadd.f32 %v150, %v202
    %v204 = vpop.f32.mrf.mxu0
    %v205 = vpop.f32.mrf.mxu0
    %v206 = vpop.f32.mrf.mxu0
    %207 = vdwg.mxu0
    %208 = vadd.xlane.f32.xlu0 %v203
    %v209 = vpop.xlane.xlu0 %208
    %v210 = vmul.f32 %v203, %v203
    %211 = vadd.xlane.f32.xlu0 %v210
    %v212 = vpop.xlane.xlu0 %211
    %v213 = vmul.f32 %v209, 0.0078125
    %v214 = vmul.f32 %v212, 0.0078125
    %v215 = vmul.f32 %v213, %v213
    %v216 = vsub.f32 %v214, %v215
    %v217 = vmax.f32 %v216, 0.0
    %v218 = vsub.f32 %v203, %v213
    %v219 = vadd.f32 %v217, 1e-05
    %v220 = vrsqrt.pop %v219
    %v221 = vmul.f32 %v218, %v220
    %v222 = vld [vmem:[#allocation6] sm:$0x1]
    %v224 = vlaneseq
    %v225 = vshrl.u32 %v224, 7
    %v226 = vsub.s32 0, %v225
    %v227 = vrot.slane %v222, %v226
    %v229 = vmul.f32 %v221, %v227
    %v230 = vld [vmem:[#allocation7] sm:$0x1]
    %v232 = vlaneseq
    %v233 = vshrl.u32 %v232, 7
    %v234 = vsub.s32 0, %v233
    %v235 = vrot.slane %v230, %v234
    %v237 = vadd.f32 %v229, %v235
    %v238 = vmax.f32 %v237, 0.0
    %v239 = vpack.c.bf16 %v238, %v238
    %v240 = vld [vmem:[#allocation9] sm:$0xff]
    %v241 = vld [vmem:[#allocation9 + $0x8] sm:$0xff]
    %v242 = vld [vmem:[#allocation9 + $0x10] sm:$0xff]
    %v243 = vld [vmem:[#allocation9 + $0x18] sm:$0xff]
    %v244 = vld [vmem:[#allocation9 + $0x20] sm:$0xff]
    %v245 = vld [vmem:[#allocation9 + $0x28] sm:$0xff]
    %v246 = vld [vmem:[#allocation9 + $0x30] sm:$0xff]
    %v247 = vld [vmem:[#allocation9 + $0x38] sm:$0xff]
    %v248 = vld [vmem:[#allocation9 + $0x40] sm:$0xff]
    %v249 = vld [vmem:[#allocation9 + $0x48] sm:$0xff]
    %v250 = vld [vmem:[#allocation9 + $0x50] sm:$0xff]
    %v251 = vld [vmem:[#allocation9 + $0x58] sm:$0xff]
    %v252 = vld [vmem:[#allocation9 + $0x60] sm:$0xff]
    %v253 = vld [vmem:[#allocation9 + $0x68] sm:$0xff]
    %v254 = vld [vmem:[#allocation9 + $0x70] sm:$0xff]
    %v255 = vld [vmem:[#allocation9 + $0x78] sm:$0xff]
    %v256 = vld [vmem:[%s6] sm:$0x3]
    %v258 = vlaneseq
    %v259 = vshrl.u32 %v258, 7
    %v260 = vsub.s32 0, %v259
    %v261 = vrot.slane %v256, %v260
    %v262 = vlaneseq
    %v263 = vshrl.u32 %v262, 7
    %v264 = vsub.s32 1, %v263
    %v265 = vrot.slane %v256, %v264
    %v284 = vunpack.c.l.b16 %v240
    %v285 = vunpack.c.h.b16 %v240
    %v286 = vunpack.c.l.b16 %v241
    %v287 = vunpack.c.h.b16 %v241
    %v288 = vunpack.c.l.b16 %v242
    %v289 = vunpack.c.h.b16 %v242
    %v290 = vunpack.c.l.b16 %v243
    %v291 = vunpack.c.h.b16 %v243
    %v292 = vunpack.c.l.b16 %v244
    %v293 = vunpack.c.h.b16 %v244
    %v294 = vunpack.c.l.b16 %v245
    %v295 = vunpack.c.h.b16 %v245
    %v296 = vunpack.c.l.b16 %v246
    %v297 = vunpack.c.h.b16 %v246
    %v298 = vunpack.c.l.b16 %v247
    %v299 = vunpack.c.h.b16 %v247
    %v300 = vunpack.c.l.b16 %v248
    %v301 = vunpack.c.h.b16 %v248
    %v302 = vunpack.c.l.b16 %v249
    %v303 = vunpack.c.h.b16 %v249
    %v304 = vunpack.c.l.b16 %v250
    %v305 = vunpack.c.h.b16 %v250
    %v306 = vunpack.c.l.b16 %v251
    %v307 = vunpack.c.h.b16 %v251
    %v308 = vunpack.c.l.b16 %v252
    %v309 = vunpack.c.h.b16 %v252
    %v310 = vunpack.c.l.b16 %v253
    %v311 = vunpack.c.h.b16 %v253
    %v312 = vunpack.c.l.b16 %v254
    %v313 = vunpack.c.h.b16 %v254
    %v314 = vunpack.c.l.b16 %v255
    %v315 = vunpack.c.h.b16 %v255
    %v316 = vpack.c.b16 %v286, %v284
    %v317 = vpack.c.b16 %v287, %v285
    %v318 = vpack.c.b16 %v290, %v288
    %v319 = vpack.c.b16 %v291, %v289
    %v320 = vpack.c.b16 %v294, %v292
    %v321 = vpack.c.b16 %v295, %v293
    %v322 = vpack.c.b16 %v298, %v296
    %v323 = vpack.c.b16 %v299, %v297
    %v324 = vpack.c.b16 %v302, %v300
    %v325 = vpack.c.b16 %v303, %v301
    %v326 = vpack.c.b16 %v306, %v304
    %v327 = vpack.c.b16 %v307, %v305
    %v328 = vpack.c.b16 %v310, %v308
    %v329 = vpack.c.b16 %v311, %v309
    %v330 = vpack.c.b16 %v314, %v312
    %v331 = vpack.c.b16 %v315, %v313
    %348 = vmatprep.subr.bf16.mxu0 %v331
    %349 = vmatpush1.bf16.msra.mxu0 %v330
    %350 = vmatprep.subr.bf16.mxu0 %v329
    %351 = vmatpush1.bf16.msra.mxu0 %v328
    %352 = vmatprep.subr.bf16.mxu0 %v327
    %353 = vmatpush1.bf16.msra.mxu0 %v326
    %354 = vmatprep.subr.bf16.mxu0 %v325
    %355 = vmatpush1.bf16.msra.mxu0 %v324
    %356 = vmatprep.subr.bf16.mxu0 %v323
    %357 = vmatpush1.bf16.msra.mxu0 %v322
    %358 = vmatprep.subr.bf16.mxu0 %v321
    %359 = vmatpush1.bf16.msra.mxu0 %v320
    %360 = vmatprep.subr.bf16.mxu0 %v319
    %361 = vmatpush1.bf16.msra.mxu0 %v318
    %362 = vmatprep.subr.bf16.mxu0 %v317
    %363 = vmatpush1.bf16.msra.mxu0 %v316
    %364 = vmatprep.subr.bf16.mxu0 0
    %365 = vmatpush2.bf16.msra.mxu0 0
    %366 = vmatprep.subr.bf16.mxu0 0
    %367 = vmatpush2.bf16.msra.mxu0 0
    %368 = vmatprep.subr.bf16.mxu0 0
    %369 = vmatpush2.bf16.msra.mxu0 0
    %370 = vmatprep.subr.bf16.mxu0 0
    %371 = vmatpush2.bf16.msra.mxu0 0
    %372 = vmatprep.subr.bf16.mxu0 0
    %373 = vmatpush2.bf16.msra.mxu0 0
    %374 = vmatprep.subr.bf16.mxu0 0
    %375 = vmatpush2.bf16.msra.mxu0 0
    %376 = vmatprep.subr.bf16.mxu0 0
    %377 = vmatpush2.bf16.msra.mxu0 0
    %378 = vmatprep.subr.bf16.mxu0 0
    %379 = vmatpush2.bf16.msra.mxu0 0
    %380 = vmatprep.mubr.bf16.mxu0 0
    %381 = vmatmul.mubr.bf16.gmra.mxu0 %v239
    %v382 = vpop.f32.mrf.mxu0
    %v383 = vadd.f32 %v261, %v382
    %v384 = vpop.f32.mrf.mxu0
    %v385 = vadd.f32 %v265, %v384
    %v386 = vpop.f32.mrf.mxu0
    %v387 = vpop.f32.mrf.mxu0
    %388 = vdwg.mxu0
    %v389 = vadd.f32 %v383, %v385
    %390 = vadd.xlane.f32.xlu0 %v389
    %v391 = vpop.xlane.xlu0 %390
    %v392 = vmul.f32 %v383, %v383
    %v393 = vmul.f32 %v385, %v385
    %v394 = vadd.f32 %v392, %v393
    %395 = vadd.xlane.f32.xlu0 %v394
    %v396 = vpop.xlane.xlu0 %395
    %v397 = vmul.f32 %v391, 0.00390625
    %v398 = vmul.f32 %v396, 0.00390625
    %v399 = vmul.f32 %v397, %v397
    %v400 = vsub.f32 %v398, %v399
    %v401 = vmax.f32 %v400, 0.0
    %v402 = vsub.f32 %v383, %v397
    %v403 = vsub.f32 %v385, %v397
    %v404 = vadd.f32 %v401, 1e-05
    %v405 = vrsqrt.pop %v404
    %v406 = vmul.f32 %v402, %v405
    %v407 = vmul.f32 %v403, %v405
    %v408 = vld [vmem:[%s7] sm:$0x3]
    %v410 = vlaneseq
    %v411 = vshrl.u32 %v410, 7
    %v412 = vsub.s32 0, %v411
    %v413 = vrot.slane %v408, %v412
    %v414 = vlaneseq
    %v415 = vshrl.u32 %v414, 7
    %v416 = vsub.s32 1, %v415
    %v417 = vrot.slane %v408, %v416
    %v420 = vmul.f32 %v406, %v413
    %v421 = vmul.f32 %v407, %v417
    %v422 = vld [vmem:[%s8] sm:$0x3]
    %v424 = vlaneseq
    %v425 = vshrl.u32 %v424, 7
    %v426 = vsub.s32 0, %v425
    %v427 = vrot.slane %v422, %v426
    %v428 = vlaneseq
    %v429 = vshrl.u32 %v428, 7
    %v430 = vsub.s32 1, %v429
    %v431 = vrot.slane %v422, %v430
    %v434 = vadd.f32 %v420, %v427
    %v435 = vadd.f32 %v421, %v431
    %v436 = vmax.f32 %v434, 0.0
    %v437 = vmax.f32 %v435, 0.0
    %v438 = vpack.c.bf16 %v436, %v436
    %v439 = vpack.c.bf16 %v437, %v437
    %v440 = vld [vmem:[#allocation10] sm:$0xff]
    %v441 = vld [vmem:[#allocation10 + $0x8] sm:$0xff]
    %v442 = vld [vmem:[#allocation10 + $0x10] sm:$0xff]
    %v443 = vld [vmem:[#allocation10 + $0x18] sm:$0xff]
    %v444 = vld [vmem:[#allocation10 + $0x20] sm:$0xff]
    %v445 = vld [vmem:[#allocation10 + $0x28] sm:$0xff]
    %v446 = vld [vmem:[#allocation10 + $0x30] sm:$0xff]
    %v447 = vld [vmem:[#allocation10 + $0x38] sm:$0xff]
    %v448 = vld [vmem:[#allocation10 + $0x40] sm:$0xff]
    %v449 = vld [vmem:[#allocation10 + $0x48] sm:$0xff]
    %v450 = vld [vmem:[#allocation10 + $0x50] sm:$0xff]
    %v451 = vld [vmem:[#allocation10 + $0x58] sm:$0xff]
    %v452 = vld [vmem:[#allocation10 + $0x60] sm:$0xff]
    %v453 = vld [vmem:[#allocation10 + $0x68] sm:$0xff]
    %v454 = vld [vmem:[#allocation10 + $0x70] sm:$0xff]
    %v455 = vld [vmem:[#allocation10 + $0x78] sm:$0xff]
    %v456 = vld [vmem:[#allocation10 + $0x80] sm:$0xff]
    %v457 = vld [vmem:[#allocation10 + $0x88] sm:$0xff]
    %v458 = vld [vmem:[#allocation10 + $0x90] sm:$0xff]
    %v459 = vld [vmem:[#allocation10 + $0x98] sm:$0xff]
    %v460 = vld [vmem:[#allocation10 + $0xa0] sm:$0xff]
    %v461 = vld [vmem:[#allocation10 + $0xa8] sm:$0xff]
    %v462 = vld [vmem:[#allocation10 + $0xb0] sm:$0xff]
    %v463 = vld [vmem:[#allocation10 + $0xb8] sm:$0xff]
    %v464 = vld [vmem:[#allocation10 + $0xc0] sm:$0xff]
    %v465 = vld [vmem:[#allocation10 + $0xc8] sm:$0xff]
    %v466 = vld [vmem:[#allocation10 + $0xd0] sm:$0xff]
    %v467 = vld [vmem:[#allocation10 + $0xd8] sm:$0xff]
    %v468 = vld [vmem:[#allocation10 + $0xe0] sm:$0xff]
    %v469 = vld [vmem:[#allocation10 + $0xe8] sm:$0xff]
    %v470 = vld [vmem:[#allocation10 + $0xf0] sm:$0xff]
    %v471 = vld [vmem:[#allocation10 + $0xf8] sm:$0xff]
    %v472 = vld [vmem:[%s10] sm:$0x3]
    %v474 = vlaneseq
    %v475 = vshrl.u32 %v474, 7
    %v476 = vsub.s32 0, %v475
    %v477 = vrot.slane %v472, %v476
    %v478 = vlaneseq
    %v479 = vshrl.u32 %v478, 7
    %v480 = vsub.s32 1, %v479
    %v481 = vrot.slane %v472, %v480
    %v516 = vunpack.c.l.b16 %v440
    %v517 = vunpack.c.h.b16 %v440
    %v518 = vunpack.c.l.b16 %v441
    %v519 = vunpack.c.h.b16 %v441
    %v520 = vunpack.c.l.b16 %v442
    %v521 = vunpack.c.h.b16 %v442
    %v522 = vunpack.c.l.b16 %v443
    %v523 = vunpack.c.h.b16 %v443
    %v524 = vunpack.c.l.b16 %v444
    %v525 = vunpack.c.h.b16 %v444
    %v526 = vunpack.c.l.b16 %v445
    %v527 = vunpack.c.h.b16 %v445
    %v528 = vunpack.c.l.b16 %v446
    %v529 = vunpack.c.h.b16 %v446
    %v530 = vunpack.c.l.b16 %v447
    %v531 = vunpack.c.h.b16 %v447
    %v532 = vunpack.c.l.b16 %v448
    %v533 = vunpack.c.h.b16 %v448
    %v534 = vunpack.c.l.b16 %v449
    %v535 = vunpack.c.h.b16 %v449
    %v536 = vunpack.c.l.b16 %v450
    %v537 = vunpack.c.h.b16 %v450
    %v538 = vunpack.c.l.b16 %v451
    %v539 = vunpack.c.h.b16 %v451
    %v540 = vunpack.c.l.b16 %v452
    %v541 = vunpack.c.h.b16 %v452
    %v542 = vunpack.c.l.b16 %v453
    %v543 = vunpack.c.h.b16 %v453
    %v544 = vunpack.c.l.b16 %v454
    %v545 = vunpack.c.h.b16 %v454
    %v546 = vunpack.c.l.b16 %v455
    %v547 = vunpack.c.h.b16 %v455
    %v548 = vunpack.c.l.b16 %v456
    %v549 = vunpack.c.h.b16 %v456
    %v550 = vunpack.c.l.b16 %v457
    %v551 = vunpack.c.h.b16 %v457
    %v552 = vunpack.c.l.b16 %v458
    %v553 = vunpack.c.h.b16 %v458
    %v554 = vunpack.c.l.b16 %v459
    %v555 = vunpack.c.h.b16 %v459
    %v556 = vunpack.c.l.b16 %v460
    %v557 = vunpack.c.h.b16 %v460
    %v558 = vunpack.c.l.b16 %v461
    %v559 = vunpack.c.h.b16 %v461
    %v560 = vunpack.c.l.b16 %v462
    %v561 = vunpack.c.h.b16 %v462
    %v562 = vunpack.c.l.b16 %v463
    %v563 = vunpack.c.h.b16 %v463
    %v564 = vunpack.c.l.b16 %v464
    %v565 = vunpack.c.h.b16 %v464
    %v566 = vunpack.c.l.b16 %v465
    %v567 = vunpack.c.h.b16 %v465
    %v568 = vunpack.c.l.b16 %v466
    %v569 = vunpack.c.h.b16 %v466
    %v570 = vunpack.c.l.b16 %v467
    %v571 = vunpack.c.h.b16 %v467
    %v572 = vunpack.c.l.b16 %v468
    %v573 = vunpack.c.h.b16 %v468
    %v574 = vunpack.c.l.b16 %v469
    %v575 = vunpack.c.h.b16 %v469
    %v576 = vunpack.c.l.b16 %v470
    %v577 = vunpack.c.h.b16 %v470
    %v578 = vunpack.c.l.b16 %v471
    %v579 = vunpack.c.h.b16 %v471
    %v580 = vpack.c.b16 %v518, %v516
    %v581 = vpack.c.b16 %v519, %v517
    %v582 = vpack.c.b16 %v522, %v520
    %v583 = vpack.c.b16 %v523, %v521
    %v584 = vpack.c.b16 %v526, %v524
    %v585 = vpack.c.b16 %v527, %v525
    %v586 = vpack.c.b16 %v530, %v528
    %v587 = vpack.c.b16 %v531, %v529
    %v588 = vpack.c.b16 %v534, %v532
    %v589 = vpack.c.b16 %v535, %v533
    %v590 = vpack.c.b16 %v538, %v536
    %v591 = vpack.c.b16 %v539, %v537
    %v592 = vpack.c.b16 %v542, %v540
    %v593 = vpack.c.b16 %v543, %v541
    %v594 = vpack.c.b16 %v546, %v544
    %v595 = vpack.c.b16 %v547, %v545
    %v596 = vpack.c.b16 %v550, %v548
    %v597 = vpack.c.b16 %v551, %v549
    %v598 = vpack.c.b16 %v554, %v552
    %v599 = vpack.c.b16 %v555, %v553
    %v600 = vpack.c.b16 %v558, %v556
    %v601 = vpack.c.b16 %v559, %v557
    %v602 = vpack.c.b16 %v562, %v560
    %v603 = vpack.c.b16 %v563, %v561
    %v604 = vpack.c.b16 %v566, %v564
    %v605 = vpack.c.b16 %v567, %v565
    %v606 = vpack.c.b16 %v570, %v568
    %v607 = vpack.c.b16 %v571, %v569
    %v608 = vpack.c.b16 %v574, %v572
    %v609 = vpack.c.b16 %v575, %v573
    %v610 = vpack.c.b16 %v578, %v576
    %v611 = vpack.c.b16 %v579, %v577
    %644 = vmatprep.subr.bf16.mxu0 %v595
    %645 = vmatpush1.bf16.msra.mxu0 %v594
    %646 = vmatprep.subr.bf16.mxu0 %v593
    %647 = vmatpush1.bf16.msra.mxu0 %v592
    %648 = vmatprep.subr.bf16.mxu0 %v591
    %649 = vmatpush1.bf16.msra.mxu0 %v590
    %650 = vmatprep.subr.bf16.mxu0 %v589
    %651 = vmatpush1.bf16.msra.mxu0 %v588
    %652 = vmatprep.subr.bf16.mxu0 %v587
    %653 = vmatpush1.bf16.msra.mxu0 %v586
    %654 = vmatprep.subr.bf16.mxu0 %v585
    %655 = vmatpush1.bf16.msra.mxu0 %v584
    %656 = vmatprep.subr.bf16.mxu0 %v583
    %657 = vmatpush1.bf16.msra.mxu0 %v582
    %658 = vmatprep.subr.bf16.mxu0 %v581
    %659 = vmatpush1.bf16.msra.mxu0 %v580
    %660 = vmatprep.subr.bf16.mxu0 %v611
    %661 = vmatpush2.bf16.msra.mxu0 %v610
    %662 = vmatprep.subr.bf16.mxu0 %v609
    %663 = vmatpush2.bf16.msra.mxu0 %v608
    %664 = vmatprep.subr.bf16.mxu0 %v607
    %665 = vmatpush2.bf16.msra.mxu0 %v606
    %666 = vmatprep.subr.bf16.mxu0 %v605
    %667 = vmatpush2.bf16.msra.mxu0 %v604
    %668 = vmatprep.subr.bf16.mxu0 %v603
    %669 = vmatpush2.bf16.msra.mxu0 %v602
    %670 = vmatprep.subr.bf16.mxu0 %v601
    %671 = vmatpush2.bf16.msra.mxu0 %v600
    %672 = vmatprep.subr.bf16.mxu0 %v599
    %673 = vmatpush2.bf16.msra.mxu0 %v598
    %674 = vmatprep.subr.bf16.mxu0 %v597
    %675 = vmatpush2.bf16.msra.mxu0 %v596
    %676 = vmatprep.mubr.bf16.mxu0 %v439
    %677 = vmatmul.mubr.bf16.gmra.mxu0 %v438
    %v678 = vpop.f32.mrf.mxu0
    %v679 = vadd.f32 %v477, %v678
    %v680 = vpop.f32.mrf.mxu0
    %v681 = vadd.f32 %v481, %v680
    %v682 = vpop.f32.mrf.mxu0
    %v683 = vpop.f32.mrf.mxu0
    %684 = vdwg.mxu0
    %v685 = vadd.f32 %v679, %v681
    %686 = vadd.xlane.f32.xlu0 %v685
    %v687 = vpop.xlane.xlu0 %686
    %v688 = vmul.f32 %v679, %v679
    %v689 = vmul.f32 %v681, %v681
    %v690 = vadd.f32 %v688, %v689
    %691 = vadd.xlane.f32.xlu0 %v690
    %v692 = vpop.xlane.xlu0 %691
    %v693 = vmul.f32 %v687, 0.00390625
    %v694 = vmul.f32 %v692, 0.00390625
    %v695 = vmul.f32 %v693, %v693
    %v696 = vsub.f32 %v694, %v695
    %v697 = vmax.f32 %v696, 0.0
    %v698 = vsub.f32 %v679, %v693
    %v699 = vsub.f32 %v681, %v693
    %v700 = vadd.f32 %v697, 1e-05
    %v701 = vrsqrt.pop %v700
    %v702 = vmul.f32 %v698, %v701
    %v703 = vmul.f32 %v699, %v701
    %v704 = vld [vmem:[%s11] sm:$0x3]
    %v706 = vlaneseq
    %v707 = vshrl.u32 %v706, 7
    %v708 = vsub.s32 0, %v707
    %v709 = vrot.slane %v704, %v708
    %v710 = vlaneseq
    %v711 = vshrl.u32 %v710, 7
    %v712 = vsub.s32 1, %v711
    %v713 = vrot.slane %v704, %v712
    %v716 = vmul.f32 %v702, %v709
    %v717 = vmul.f32 %v703, %v713
    %v718 = vld [vmem:[%s12] sm:$0x3]
    %v720 = vlaneseq
    %v721 = vshrl.u32 %v720, 7
    %v722 = vsub.s32 0, %v721
    %v723 = vrot.slane %v718, %v722
    %v724 = vlaneseq
    %v725 = vshrl.u32 %v724, 7
    %v726 = vsub.s32 1, %v725
    %v727 = vrot.slane %v718, %v726
    %v730 = vadd.f32 %v716, %v723
    %v731 = vadd.f32 %v717, %v727
    %v732 = vmax.f32 %v730, 0.0
    %v733 = vmax.f32 %v731, 0.0
    %v734 = vpack.c.bf16 %v732, %v732
    %v735 = vpack.c.bf16 %v733, %v733
    %v736 = vld [vmem:[#allocation12] sm:$0xf]
    %v737 = vld [vmem:[#allocation12 + $0x4] sm:$0xf]
    %v738 = vld [vmem:[#allocation12 + $0x8] sm:$0xf]
    %v739 = vld [vmem:[#allocation12 + $0xc] sm:$0xf]
    %v740 = vld [vmem:[#allocation12 + $0x10] sm:$0xf]
    %v741 = vld [vmem:[#allocation12 + $0x14] sm:$0xf]
    %v742 = vld [vmem:[#allocation12 + $0x18] sm:$0xf]
    %v743 = vld [vmem:[#allocation12 + $0x1c] sm:$0xf]
    %v744 = vld [vmem:[#allocation12 + $0x20] sm:$0xf]
    %v745 = vld [vmem:[#allocation12 + $0x24] sm:$0xf]
    %v746 = vld [vmem:[#allocation12 + $0x28] sm:$0xf]
    %v747 = vld [vmem:[#allocation12 + $0x2c] sm:$0xf]
    %v748 = vld [vmem:[#allocation12 + $0x30] sm:$0xf]
    %v749 = vld [vmem:[#allocation12 + $0x34] sm:$0xf]
    %v750 = vld [vmem:[#allocation12 + $0x38] sm:$0xf]
    %v751 = vld [vmem:[#allocation12 + $0x3c] sm:$0xf]
    %v752 = vld [vmem:[#allocation12 + $0x40] sm:$0xf]
    %v753 = vld [vmem:[#allocation12 + $0x44] sm:$0xf]
    %v754 = vld [vmem:[#allocation12 + $0x48] sm:$0xf]
    %v755 = vld [vmem:[#allocation12 + $0x4c] sm:$0xf]
    %v756 = vld [vmem:[#allocation12 + $0x50] sm:$0xf]
    %v757 = vld [vmem:[#allocation12 + $0x54] sm:$0xf]
    %v758 = vld [vmem:[#allocation12 + $0x58] sm:$0xf]
    %v759 = vld [vmem:[#allocation12 + $0x5c] sm:$0xf]
    %v760 = vld [vmem:[#allocation12 + $0x60] sm:$0xf]
    %v761 = vld [vmem:[#allocation12 + $0x64] sm:$0xf]
    %v762 = vld [vmem:[#allocation12 + $0x68] sm:$0xf]
    %v763 = vld [vmem:[#allocation12 + $0x6c] sm:$0xf]
    %v764 = vld [vmem:[#allocation12 + $0x70] sm:$0xf]
    %v765 = vld [vmem:[#allocation12 + $0x74] sm:$0xf]
    %v766 = vld [vmem:[#allocation12 + $0x78] sm:$0xf]
    %v767 = vld [vmem:[#allocation12 + $0x7c] sm:$0xf]
    %v768 = vld [vmem:[%s14] sm:$0x1]
    %v770 = vlaneseq
    %v771 = vshrl.u32 %v770, 7
    %v772 = vsub.s32 0, %v771
    %v773 = vrot.slane %v768, %v772
    %v807 = vunpack.c.l.b16 %v736
    %v808 = vunpack.c.l.b16 %v737
    %v809 = vunpack.c.l.b16 %v738
    %v810 = vunpack.c.l.b16 %v739
    %v811 = vunpack.c.l.b16 %v740
    %v812 = vunpack.c.l.b16 %v741
    %v813 = vunpack.c.l.b16 %v742
    %v814 = vunpack.c.l.b16 %v743
    %v815 = vunpack.c.l.b16 %v744
    %v816 = vunpack.c.l.b16 %v745
    %v817 = vunpack.c.l.b16 %v746
    %v818 = vunpack.c.l.b16 %v747
    %v819 = vunpack.c.l.b16 %v748
    %v820 = vunpack.c.l.b16 %v749
    %v821 = vunpack.c.l.b16 %v750
    %v822 = vunpack.c.l.b16 %v751
    %v823 = vunpack.c.l.b16 %v752
    %v824 = vunpack.c.l.b16 %v753
    %v825 = vunpack.c.l.b16 %v754
    %v826 = vunpack.c.l.b16 %v755
    %v827 = vunpack.c.l.b16 %v756
    %v828 = vunpack.c.l.b16 %v757
    %v829 = vunpack.c.l.b16 %v758
    %v830 = vunpack.c.l.b16 %v759
    %v831 = vunpack.c.l.b16 %v760
    %v832 = vunpack.c.l.b16 %v761
    %v833 = vunpack.c.l.b16 %v762
    %v834 = vunpack.c.l.b16 %v763
    %v835 = vunpack.c.l.b16 %v764
    %v836 = vunpack.c.l.b16 %v765
    %v837 = vunpack.c.l.b16 %v766
    %v838 = vunpack.c.l.b16 %v767
    %v839 = vpack.c.b16 %v808, %v807
    %v840 = vpack.c.b16 %v810, %v809
    %v841 = vpack.c.b16 %v812, %v811
    %v842 = vpack.c.b16 %v814, %v813
    %v843 = vpack.c.b16 %v816, %v815
    %v844 = vpack.c.b16 %v818, %v817
    %v845 = vpack.c.b16 %v820, %v819
    %v846 = vpack.c.b16 %v822, %v821
    %v847 = vpack.c.b16 %v824, %v823
    %v848 = vpack.c.b16 %v826, %v825
    %v849 = vpack.c.b16 %v828, %v827
    %v850 = vpack.c.b16 %v830, %v829
    %v851 = vpack.c.b16 %v832, %v831
    %v852 = vpack.c.b16 %v834, %v833
    %v853 = vpack.c.b16 %v836, %v835
    %v854 = vpack.c.b16 %v838, %v837
    %871 = vmatprep.subr.bf16.mxu0 0
    %872 = vmatpush1.bf16.msra.mxu0 %v846
    %873 = vmatprep.subr.bf16.mxu0 0
    %874 = vmatpush1.bf16.msra.mxu0 %v845
    %875 = vmatprep.subr.bf16.mxu0 0
    %876 = vmatpush1.bf16.msra.mxu0 %v844
    %877 = vmatprep.subr.bf16.mxu0 0
    %878 = vmatpush1.bf16.msra.mxu0 %v843
    %879 = vmatprep.subr.bf16.mxu0 0
    %880 = vmatpush1.bf16.msra.mxu0 %v842
    %881 = vmatprep.subr.bf16.mxu0 0
    %882 = vmatpush1.bf16.msra.mxu0 %v841
    %883 = vmatprep.subr.bf16.mxu0 0
    %884 = vmatpush1.bf16.msra.mxu0 %v840
    %885 = vmatprep.subr.bf16.mxu0 0
    %886 = vmatpush1.bf16.msra.mxu0 %v839
    %887 = vmatprep.subr.bf16.mxu0 0
    %888 = vmatpush2.bf16.msra.mxu0 %v854
    %889 = vmatprep.subr.bf16.mxu0 0
    %890 = vmatpush2.bf16.msra.mxu0 %v853
    %891 = vmatprep.subr.bf16.mxu0 0
    %892 = vmatpush2.bf16.msra.mxu0 %v852
    %893 = vmatprep.subr.bf16.mxu0 0
    %894 = vmatpush2.bf16.msra.mxu0 %v851
    %895 = vmatprep.subr.bf16.mxu0 0
    %896 = vmatpush2.bf16.msra.mxu0 %v850
    %897 = vmatprep.subr.bf16.mxu0 0
    %898 = vmatpush2.bf16.msra.mxu0 %v849
    %899 = vmatprep.subr.bf16.mxu0 0
    %900 = vmatpush2.bf16.msra.mxu0 %v848
    %901 = vmatprep.subr.bf16.mxu0 0
    %902 = vmatpush2.bf16.msra.mxu0 %v847
    %903 = vmatprep.mubr.bf16.mxu0 %v735
    %904 = vmatmul.mubr.bf16.gmra.mxu0 %v734
    %v905 = vpop.f32.mrf.mxu0
    %v906 = vadd.f32 %v773, %v905
    %v907 = vpop.f32.mrf.mxu0
    %v908 = vpop.f32.mrf.mxu0
    %v909 = vpop.f32.mrf.mxu0
    %910 = vdwg.mxu0
    %v911 = vtanh.pop %v906
    %912 = vst [vmem:[%s15] sm:$0xff] %v911
    // Predicated region
    $region90: #{ddpg_actor_forward.1} parent=1 // pred_check
      _
    $region91: #{ddpg_actor_forward.1} parent=1 // pred_check_branch
      %914 = sbr.rel (0) target = $region93
    $region92: #{ddpg_actor_forward.1} parent=1 // pred_region
      _
    $region93: #{ddpg_actor_forward.1} parent=1 // pred_fallthru
      _
    // Predicated region
    $region94: #{ddpg_actor_forward.1} parent=1 // pred_check
      _
    $region95: #{ddpg_actor_forward.1} parent=1 // pred_check_branch
      %916 = sbr.rel (0) target = $region97
    $region96: #{ddpg_actor_forward.1} parent=1 // pred_region
      _
    $region97: #{ddpg_actor_forward.1} parent=1 // pred_fallthru
      _
    %917 = vsyncpa [#allocation3], 1
    %918 = vsyncpa [#allocation5], 1
    %919 = vsyncpa [#allocation8], 1
    %920 = vsyncpa [#allocation11], 1

</llo_original>
